<compile_context>
chip_gen: v7x
topology: tpu7x:2x2x1
jax: 0.10.0
libtpu: 0.0.40
codegen_flags: <defaults>
</compile_context>

<pallas_src>
import jax
import jax.numpy as jnp
from jax.experimental import pallas as pl
from jax.experimental.pallas import tpu as pltpu

KS = 7
SIGMA = 1.5


def gaussian_1d(ks, sigma):
    half = (ks - 1) / 2.0
    x = jnp.arange(ks, dtype=jnp.float32) - half
    g = jnp.exp(-(x * x) / (2.0 * sigma * sigma))
    return g / jnp.sum(g)


def banded_blur_matrix(n, g1d):
    # A[i, j] = g[j - i + 3] for |i - j| <= 3 else 0  (zero-padded "same" conv).
    # Symmetric because g is symmetric.
    idx = jnp.arange(n)
    d = idx[None, :] - idx[:, None]
    vals = jnp.take(g1d, jnp.clip(d + (KS - 1) // 2, 0, KS - 1))
    return jnp.where(jnp.abs(d) <= (KS - 1) // 2, vals, 0.0).astype(jnp.float32)


# --------------------------- fused Pallas kernel ---------------------------
def fused_kernel(x_ref, kblur_ref, wx_ref, wb_ref, bias_ref, o_ref):
    xb = x_ref[0]                                     # (T*C, H*W) current batch
    # spatial 7x7 blur of every frame, as one lane-dense matmul (K = 256)
    blurred = jnp.dot(xb, kblur_ref[...], preferred_element_type=jnp.float32)
    # 0.5*post_conv(x)  +  0.5*post_conv(prev+next blurred)  +  folded biases
    out = (jnp.dot(wx_ref[...], xb, preferred_element_type=jnp.float32)
           + jnp.dot(wb_ref[...], blurred, preferred_element_type=jnp.float32)
           + bias_ref[...])
    o_ref[0] = out.astype(o_ref.dtype)


def temporal_weighted_aggregate(x, w_post, b_post, a_h, a_w):
    # x: (B, T, C, H, W) float32
    B, T, C, H, W = x.shape
    HW = H * W
    TC = T * C
    x_flat = x.astype(jnp.float32).reshape(B, TC, HW)   # row n = t*C + c

    # --- tiny weight-derived matrices (host/XLA side, negligible) ---
    # blur: vec_rowmajor(A_H @ X @ A_W) = vec(X) @ kron(A_H, A_W)  (both symmetric)
    k_blur = jnp.kron(a_h, a_w).astype(jnp.float32)                 # (HW, HW)
    # temporal adjacency: S[t, t'] = 1 iff |t - t'| == 1 (zeros handle boundaries)
    idx = jnp.arange(T)
    S = (jnp.abs(idx[:, None] - idx[None, :]) == 1).astype(jnp.float32)
    w3 = w_post.astype(jnp.float32)                                 # (C, C)
    wx = 0.5 * jnp.kron(jnp.eye(T, dtype=jnp.float32), w3)          # (TC, TC)
    wb = 0.5 * jnp.kron(S, w3)                                      # (TC, TC)
    # atten "+0.5" pushed through post_conv + post_conv bias, tiled over T
    bias_c = 0.5 * jnp.sum(w3, axis=1) + b_post.astype(jnp.float32) # (C,)
    bias = jnp.tile(bias_c, T).reshape(TC, 1)                       # (TC, 1)

    out = pl.pallas_call(
        fused_kernel,
        out_shape=jax.ShapeDtypeStruct((B, TC, HW), jnp.float32),
        grid=(B,),
        in_specs=[
            pl.BlockSpec((1, TC, HW), lambda b: (b, 0, 0)),   # x slab for batch b
            pl.BlockSpec((HW, HW), lambda b: (0, 0)),         # blur matrix
            pl.BlockSpec((TC, TC), lambda b: (0, 0)),         # 0.5*kron(I_T, W3)
            pl.BlockSpec((TC, TC), lambda b: (0, 0)),         # 0.5*kron(S, W3)
            pl.BlockSpec((TC, 1), lambda b: (0, 0)),          # folded bias column
        ],
        out_specs=pl.BlockSpec((1, TC, HW), lambda b: (b, 0, 0)),
        compiler_params=pltpu.CompilerParams(
            dimension_semantics=("parallel",)),
    )(x_flat, k_blur, wx, wb, bias)

    # already in 'b t c h w' order (matches final rearrange in PyTorch)
    return out.reshape(B, T, C, H, W)


# --------------------------- pure-JAX reference ---------------------------
def reference(x, w_post, b_post, g1d):
    B, T, C, H, W = x.shape
    k2d = jnp.outer(g1d, g1d)
    frames = x.reshape(B * T * C, 1, H, W)
    blurred = jax.lax.conv_general_dilated(
        frames, k2d[None, None], window_strides=(1, 1), padding="SAME")
    blurred = blurred.reshape(B, T, C, H, W)
    prev = jnp.pad(blurred[:, :-1], ((0, 0), (1, 0), (0, 0), (0, 0), (0, 0)))
    nxt = jnp.pad(blurred[:, 1:], ((0, 0), (0, 1), (0, 0), (0, 0), (0, 0)))
    agg = 0.5 * (x + prev + nxt) + 0.5
    out = jnp.einsum("oc,btchw->btohw", w_post, agg)
    return out + b_post[None, None, :, None, None]


if __name__ == "__main__":
    B, T, C, H, W = 2, 8, 4, 16, 16
    key = jax.random.PRNGKey(0)
    kx, kw, kb = jax.random.split(key, 3)
    x = jax.random.normal(kx, (B, T, C, H, W), dtype=jnp.float32)
    # post_conv parameters (Conv3d(dim, dim, 1) -> weight (C, C), bias (C,))
    w_post = jax.random.normal(kw, (C, C), dtype=jnp.float32) * 0.1
    b_post = jax.random.normal(kb, (C,), dtype=jnp.float32) * 0.1

    g1d = gaussian_1d(KS, SIGMA)
    a_h = banded_blur_matrix(H, g1d)
    a_w = banded_blur_matrix(W, g1d)

    fwd = jax.jit(temporal_weighted_aggregate)
    out = fwd(x, w_post, b_post, a_h, a_w)
    out = jax.block_until_ready(out)

    ref = reference(x, w_post, b_post, g1d)
    assert out.shape == (B, T, C, H, W)
    err = float(jnp.max(jnp.abs(out - ref)))
    assert jnp.allclose(out, ref, atol=1e-4, rtol=1e-4), err
    print("KERNEL_OK")
</pallas_src>

<mosaic_0001>
module attributes {stable_mosaic.version = 11 : i64} {
  func.func @fused_kernel(%arg0: i32, %arg1: memref<1x32x256xf32, #tpu.memory_space<vmem>>, %arg2: memref<256x256xf32, #tpu.memory_space<vmem>>, %arg3: memref<32x32xf32, #tpu.memory_space<vmem>>, %arg4: memref<32x32xf32, #tpu.memory_space<vmem>>, %arg5: memref<32x1xf32, #tpu.memory_space<vmem>>, %arg6: memref<1x32x256xf32, #tpu.memory_space<vmem>>) attributes {dimension_semantics = [#tpu.dimension_semantics<parallel>], iteration_bounds = array<i64: 2>, scalar_prefetch = 0 : i64, scratch_operands = 0 : i64, tpu.core_type = #tpu.core_type<tc>, window_params = [{transform_indices = @transform_0, window_bounds = array<i64: 1, 32, 256>}, {pipeline_mode = #tpu.pipeline_mode<synchronous>, transform_indices = @transform_1, window_bounds = array<i64: 256, 256>}, {pipeline_mode = #tpu.pipeline_mode<synchronous>, transform_indices = @transform_2, window_bounds = array<i64: 32, 32>}, {pipeline_mode = #tpu.pipeline_mode<synchronous>, transform_indices = @transform_3, window_bounds = array<i64: 32, 32>}, {pipeline_mode = #tpu.pipeline_mode<synchronous>, transform_indices = @transform_4, window_bounds = array<i64: 32, 1>}, {transform_indices = @transform_5, window_bounds = array<i64: 1, 32, 256>}]} {
    %c0 = arith.constant 0 : index
    %c0_0 = arith.constant 0 : index
    %c0_1 = arith.constant 0 : index
    %0 = vector.load %arg1[%c0, %c0_0, %c0_1] : memref<1x32x256xf32, #tpu.memory_space<vmem>>, vector<1x32x256xf32>
    %1 = vector.shape_cast %0 : vector<1x32x256xf32> to vector<32x256xf32>
    %c0_2 = arith.constant 0 : index
    %c0_3 = arith.constant 0 : index
    %2 = vector.load %arg2[%c0_2, %c0_3] : memref<256x256xf32, #tpu.memory_space<vmem>>, vector<256x256xf32>
    %cst = arith.constant dense<0.000000e+00> : vector<32x256xf32>
    %3 = tpu.matmul %1, %2, %cst {dimension_numbers = #tpu.dot_dimension_numbers<[1], [0], [0], [1], [0, 0, 1, 1], [], []>} : vector<32x256xf32>, vector<256x256xf32>, vector<32x256xf32> -> vector<32x256xf32>
    %c0_4 = arith.constant 0 : index
    %c0_5 = arith.constant 0 : index
    %4 = vector.load %arg3[%c0_4, %c0_5] : memref<32x32xf32, #tpu.memory_space<vmem>>, vector<32x32xf32>
    %cst_6 = arith.constant dense<0.000000e+00> : vector<32x256xf32>
    %5 = tpu.matmul %4, %1, %cst_6 {dimension_numbers = #tpu.dot_dimension_numbers<[1], [0], [0], [1], [0, 0, 1, 1], [], []>} : vector<32x32xf32>, vector<32x256xf32>, vector<32x256xf32> -> vector<32x256xf32>
    %c0_7 = arith.constant 0 : index
    %c0_8 = arith.constant 0 : index
    %6 = vector.load %arg4[%c0_7, %c0_8] : memref<32x32xf32, #tpu.memory_space<vmem>>, vector<32x32xf32>
    %cst_9 = arith.constant dense<0.000000e+00> : vector<32x256xf32>
    %7 = tpu.matmul %6, %3, %cst_9 {dimension_numbers = #tpu.dot_dimension_numbers<[1], [0], [0], [1], [0, 0, 1, 1], [], []>} : vector<32x32xf32>, vector<32x256xf32>, vector<32x256xf32> -> vector<32x256xf32>
    %8 = arith.addf %5, %7 : vector<32x256xf32>
    %c0_10 = arith.constant 0 : index
    %c0_11 = arith.constant 0 : index
    %9 = vector.load %arg5[%c0_10, %c0_11] : memref<32x1xf32, #tpu.memory_space<vmem>>, vector<32x1xf32>
    %10 = vector.broadcast %9 : vector<32x1xf32> to vector<32x256xf32>
    %11 = arith.addf %8, %10 : vector<32x256xf32>
    %c0_12 = arith.constant 0 : index
    %c0_13 = arith.constant 0 : index
    %c0_14 = arith.constant 0 : index
    %12 = vector.load %arg6[%c0_12, %c0_13, %c0_14] : memref<1x32x256xf32, #tpu.memory_space<vmem>>, vector<1x32x256xf32>
    %13 = vector.shape_cast %12 : vector<1x32x256xf32> to vector<32x256xf32>
    %14 = vector.shape_cast %11 : vector<32x256xf32> to vector<1x32x256xf32>
    tpu.vector_store %arg6[%c0_12, %c0_13, %c0_14], %14 {strides = array<i32>} : memref<1x32x256xf32, #tpu.memory_space<vmem>>, vector<1x32x256xf32>,
    return
  }
  func.func @transform_0(%arg0: i32) -> (i32, i32, i32) {
    %c0_i32 = arith.constant 0 : i32
    %c0_i32_0 = arith.constant 0 : i32
    %c0_i32_1 = arith.constant 0 : i32
    return %arg0, %c0_i32, %c0_i32_0 : i32, i32, i32
  }
  func.func @transform_1(%arg0: i32) -> (i32, i32) {
    %c0_i32 = arith.constant 0 : i32
    %c0_i32_0 = arith.constant 0 : i32
    %c0_i32_1 = arith.constant 0 : i32
    return %c0_i32, %c0_i32_0 : i32, i32
  }
  func.func @transform_2(%arg0: i32) -> (i32, i32) {
    %c0_i32 = arith.constant 0 : i32
    %c0_i32_0 = arith.constant 0 : i32
    %c0_i32_1 = arith.constant 0 : i32
    return %c0_i32, %c0_i32_0 : i32, i32
  }
  func.func @transform_3(%arg0: i32) -> (i32, i32) {
    %c0_i32 = arith.constant 0 : i32
    %c0_i32_0 = arith.constant 0 : i32
    %c0_i32_1 = arith.constant 0 : i32
    return %c0_i32, %c0_i32_0 : i32, i32
  }
  func.func @transform_4(%arg0: i32) -> (i32, i32) {
    %c0_i32 = arith.constant 0 : i32
    %c0_i32_0 = arith.constant 0 : i32
    %c0_i32_1 = arith.constant 0 : i32
    return %c0_i32, %c0_i32_0 : i32, i32
  }
  func.func @transform_5(%arg0: i32) -> (i32, i32, i32) {
    %c0_i32 = arith.constant 0 : i32
    %c0_i32_0 = arith.constant 0 : i32
    %c0_i32_1 = arith.constant 0 : i32
    return %arg0, %c0_i32, %c0_i32_0 : i32, i32, i32
  }
}

</mosaic_0001>

<llo_original>
// kernel: tile.8
$region0: #{tile.8}
  #allocation0 [shape = 's32[1]{0}', space=sflag, size = 0x4, scoped, tag = 'scoped memory for tile.8']
  %s0 = inlined_call_operand.vmem [shape: f32[4], index: 0, kind: input, shape index: {}]
  %s1 = inlined_call_operand.vmem [shape: f32[8,4], index: 1, kind: output, shape index: {}]
  // Predicated region
  $region2: #{tile.8} parent=0 // pred_check
    _
  $region3: #{tile.8} parent=0 // pred_check_branch
    %3 = sbr.rel (0) target = $region5
  $region4: #{tile.8} parent=0 // pred_region
    _
  $region5: #{tile.8} parent=0 // pred_fallthru
    _
  %v4 = vld [vmem:[%s0] ss:$0 sm:$0xff]
  %5 = vst [vmem:[%s1] sm:$0xff] %v4

// kernel: tile.0
$region0: #{tile.0}
  %s0 = inlined_call_operand.vmem [shape: f32[8,4], index: 0, kind: input, shape index: {}]
  %s1 = inlined_call_operand.vmem [shape: f32[32,1], index: 1, kind: output, shape index: {}]
  %v2 = vld [vmem:[%s0] sm:$0xff]
  %vm3 = vcmask 7168
  %4 = vst.msk [vmem:[%s1] ss:$4 sm:$0xff] %vm3, %v2
  %v5 = vld [vmem:[%s0] sm:$0xff]
  %6 = vrot.lane.b32.xlu0 %v5, 127
  %v7 = vpop.permute.xlu0 %6
  %vm8 = vcmask 7168
  %s9 = scalar_lea.vmem %s1, 1
  %10 = vst.msk [vmem:[%s9] ss:$4 sm:$0xff] %vm8, %v7
  %v11 = vld [vmem:[%s0] sm:$0xff]
  %12 = vrot.lane.b32.xlu0 %v11, 126
  %v13 = vpop.permute.xlu0 %12
  %vm14 = vcmask 7168
  %s15 = scalar_lea.vmem %s1, 2
  %16 = vst.msk [vmem:[%s15] ss:$4 sm:$0xff] %vm14, %v13
  %v17 = vld [vmem:[%s0] sm:$0xff]
  %18 = vrot.lane.b32.xlu0 %v17, 125
  %v19 = vpop.permute.xlu0 %18
  %vm20 = vcmask 7168
  %s21 = scalar_lea.vmem %s1, 3
  %22 = vst.msk [vmem:[%s21] ss:$4 sm:$0xff] %vm20, %v19

// kernel: temporal_weighted_aggregate.1
$region0: #{temporal_weighted_aggregate.1}
  #allocation0 [shape = 'u32[]', space=smem, size = 0x4, offset = 0x4, fixed_abs, tag = 'smem constant byte address 0x4 - core index']
  #allocation1 [shape = 'u32[144,128]{1,0:T(1,128)}', space=vmem, size = 0x12000, scoped, tag = 'internal scratch']
  %s0 = inlined_call_operand.vmem [shape: f32[2,32,256], index: 0, kind: input, shape index: {}]
  %s1 = inlined_call_operand.vmem [shape: f32[256,256], index: 1, kind: input, shape index: {}]
  %s2 = inlined_call_operand.vmem [shape: f32[32,32], index: 2, kind: input, shape index: {}]
  %s3 = inlined_call_operand.vmem [shape: f32[32,32], index: 3, kind: input, shape index: {}]
  %s4 = inlined_call_operand.vmem [shape: f32[32,1], index: 4, kind: input, shape index: {}]
  %s5 = inlined_call_operand.vmem [shape: f32[2,32,256], index: 5, kind: output, shape index: {}]
  %s6 = sld [smem:[#allocation0]]
  $region53: #{temporal_weighted_aggregate.1} parent=0
    _
  %s8 = ssub.s32 1, %s6
  %s9 = scalar_select 0, %s8, %s6
  loop: start=0, step=1, limit=4
  $region2: #{temporal_weighted_aggregate.1} parent=0 // loop_pre_header
    _
  $region3: #{temporal_weighted_aggregate.1} parent=0 // loop_header
    %s11 = sphi 0, %s15
    %p12 = scmp.ge.s32.totalorder %s11, 4
    %s21 = sphi 0, %s23
    %s24 = sphi 0, %s21
    %s25 = sphi 0, %s24
    %s41 = sphi 0, %s25
    %s45 = sphi 0, %s45
    %s47 = sphi 0, %s45
    %s48 = sphi 0, %s47
    %s62 = sphi 0, %s48
    %s66 = sphi 0, %s66
    %s68 = sphi 0, %s66
    %s69 = sphi 0, %s68
    %s83 = sphi 0, %s69
    %s87 = sphi 0, %s87
    %s89 = sphi 0, %s87
    %s90 = sphi 0, %s89
    %s104 = sphi 0, %s90
    %s108 = sphi 0, %s108
    %s110 = sphi 0, %s108
    %s111 = sphi 0, %s110
    %s125 = sphi 0, %s111
    %s131 = sphi 0, %s133
    %s134 = sphi 0, %s131
    %s135 = sphi 0, %s134
    %s151 = sphi 0, %s135
  $region4: #{temporal_weighted_aggregate.1} parent=0 // loop_header_branch
    %14 = sbr.rel (%p12) target = $region8
  $region5: #{temporal_weighted_aggregate.1} parent=0 // loop_body
    %s16 = ssub.s32 %s11, 1
    %s17 = ssub.s32 %s11, 2
    %s18 = sadd.s32 %s11, 1
    %s19 = ssub.s32 %s11, %s18
    %p20 = scmp.eq.s32.totalorder %s19, 0
    %s22 = sadd.s32 %s21, 1
    %s23 = scalar_select %p20, %s21, %s22
    %p26 = pneg %p20
    %p27 = scmp.eq.s32.totalorder %s11, 1
    %p28 = por %p26, %p27
    %p29 = scmp.ne.s32.totalorder %s21, %s24
    %p30 = scmp.eq.s32.totalorder %s11, 0
    %p31 = por %p29, %p30
    %p32 = scmp.ne.s32.totalorder %s21, %s24
    %p33 = scmp.eq.s32.totalorder %s16, 1
    %p34 = por %p32, %p33
    %p35 = scmp.ne.s32.totalorder %s24, %s25
    %p36 = scmp.eq.s32.totalorder %s16, 0
    %p37 = por %p35, %p36
    %p38 = scmp.ne.s32.totalorder %s24, %s25
    %p39 = scmp.eq.s32.totalorder %s17, 1
    %p40 = por %p38, %p39
    %p42 = scmp.ne.s32.totalorder %s25, %s41
    %p43 = scmp.eq.s32.totalorder %s17, 0
    %p44 = por %p42, %p43
    %s46 = sadd.s32 %s45, 1
    %p49 = scmp.eq.s32.totalorder %s11, 1
    %p50 = scmp.ne.s32.totalorder %s45, %s47
    %p51 = scmp.eq.s32.totalorder %s11, 0
    %p52 = por %p50, %p51
    %p53 = scmp.ne.s32.totalorder %s45, %s47
    %p54 = scmp.eq.s32.totalorder %s16, 1
    %p55 = por %p53, %p54
    %p56 = scmp.ne.s32.totalorder %s47, %s48
    %p57 = scmp.eq.s32.totalorder %s16, 0
    %p58 = por %p56, %p57
    %p59 = scmp.ne.s32.totalorder %s47, %s48
    %p60 = scmp.eq.s32.totalorder %s17, 1
    %p61 = por %p59, %p60
    %p63 = scmp.ne.s32.totalorder %s48, %s62
    %p64 = scmp.eq.s32.totalorder %s17, 0
    %p65 = por %p63, %p64
    %s67 = sadd.s32 %s66, 1
    %p70 = scmp.eq.s32.totalorder %s11, 1
    %p71 = scmp.ne.s32.totalorder %s66, %s68
    %p72 = scmp.eq.s32.totalorder %s11, 0
    %p73 = por %p71, %p72
    %p74 = scmp.ne.s32.totalorder %s66, %s68
    %p75 = scmp.eq.s32.totalorder %s16, 1
    %p76 = por %p74, %p75
    %p77 = scmp.ne.s32.totalorder %s68, %s69
    %p78 = scmp.eq.s32.totalorder %s16, 0
    %p79 = por %p77, %p78
    %p80 = scmp.ne.s32.totalorder %s68, %s69
    %p81 = scmp.eq.s32.totalorder %s17, 1
    %p82 = por %p80, %p81
    %p84 = scmp.ne.s32.totalorder %s69, %s83
    %p85 = scmp.eq.s32.totalorder %s17, 0
    %p86 = por %p84, %p85
    %s88 = sadd.s32 %s87, 1
    %p91 = scmp.eq.s32.totalorder %s11, 1
    %p92 = scmp.ne.s32.totalorder %s87, %s89
    %p93 = scmp.eq.s32.totalorder %s11, 0
    %p94 = por %p92, %p93
    %p95 = scmp.ne.s32.totalorder %s87, %s89
    %p96 = scmp.eq.s32.totalorder %s16, 1
    %p97 = por %p95, %p96
    %p98 = scmp.ne.s32.totalorder %s89, %s90
    %p99 = scmp.eq.s32.totalorder %s16, 0
    %p100 = por %p98, %p99
    %p101 = scmp.ne.s32.totalorder %s89, %s90
    %p102 = scmp.eq.s32.totalorder %s17, 1
    %p103 = por %p101, %p102
    %p105 = scmp.ne.s32.totalorder %s90, %s104
    %p106 = scmp.eq.s32.totalorder %s17, 0
    %p107 = por %p105, %p106
    %s109 = sadd.s32 %s108, 1
    %p112 = scmp.eq.s32.totalorder %s11, 1
    %p113 = scmp.ne.s32.totalorder %s108, %s110
    %p114 = scmp.eq.s32.totalorder %s11, 0
    %p115 = por %p113, %p114
    %p116 = scmp.ne.s32.totalorder %s108, %s110
    %p117 = scmp.eq.s32.totalorder %s16, 1
    %p118 = por %p116, %p117
    %p119 = scmp.ne.s32.totalorder %s110, %s111
    %p120 = scmp.eq.s32.totalorder %s16, 0
    %p121 = por %p119, %p120
    %p122 = scmp.ne.s32.totalorder %s110, %s111
    %p123 = scmp.eq.s32.totalorder %s17, 1
    %p124 = por %p122, %p123
    %p126 = scmp.ne.s32.totalorder %s111, %s125
    %p127 = scmp.eq.s32.totalorder %s17, 0
    %p128 = por %p126, %p127
    %s129 = ssub.s32 %s11, %s18
    %p130 = scmp.eq.s32.totalorder %s129, 0
    %s132 = sadd.s32 %s131, 1
    %s133 = scalar_select %p130, %s131, %s132
    %p136 = pneg %p130
    %p137 = scmp.eq.s32.totalorder %s11, 1
    %p138 = por %p136, %p137
    %p139 = scmp.ne.s32.totalorder %s131, %s134
    %p140 = scmp.eq.s32.totalorder %s11, 0
    %p141 = por %p139, %p140
    %p142 = scmp.ne.s32.totalorder %s131, %s134
    %p143 = scmp.eq.s32.totalorder %s16, 1
    %p144 = por %p142, %p143
    %p145 = scmp.ne.s32.totalorder %s134, %s135
    %p146 = scmp.eq.s32.totalorder %s16, 0
    %p147 = por %p145, %p146
    %p148 = scmp.ne.s32.totalorder %s134, %s135
    %p149 = scmp.eq.s32.totalorder %s17, 1
    %p150 = por %p148, %p149
    %p152 = scmp.ne.s32.totalorder %s135, %s151
    %p153 = scmp.eq.s32.totalorder %s17, 0
    %p154 = por %p152, %p153
    %p155 = scmp.le.s32.totalorder 1, %s11
    %p156 = scmp.lt.s32.totalorder %s11, 3
    %p157 = pnand %p155, %p156
    %p158 = pneg %p157
    // Predicated region
    $region9: #{temporal_weighted_aggregate.1} parent=5 // pred_check
      _
    $region10: #{temporal_weighted_aggregate.1} parent=5 // pred_check_branch
      %160 = sbr.rel (%p157) target = $region12
    $region11: #{temporal_weighted_aggregate.1} parent=5 // pred_region
      %s161 = ssub.s32 %s11, 1
      // Predicated region
      $region13: #{temporal_weighted_aggregate.1} parent=11 // pred_check
        %p162 = pneg %p58
      $region14: #{temporal_weighted_aggregate.1} parent=11 // pred_check_branch
        %164 = sbr.rel (%p162) target = $region16
      $region15: #{temporal_weighted_aggregate.1} parent=11 // pred_region
        _
      $region16: #{temporal_weighted_aggregate.1} parent=11 // pred_fallthru
        _
      // Predicated region
      $region17: #{temporal_weighted_aggregate.1} parent=11 // pred_check
        %p165 = pneg %p79
      $region18: #{temporal_weighted_aggregate.1} parent=11 // pred_check_branch
        %167 = sbr.rel (%p165) target = $region20
      $region19: #{temporal_weighted_aggregate.1} parent=11 // pred_region
        _
      $region20: #{temporal_weighted_aggregate.1} parent=11 // pred_fallthru
        _
      // Predicated region
      $region21: #{temporal_weighted_aggregate.1} parent=11 // pred_check
        %p168 = pneg %p100
      $region22: #{temporal_weighted_aggregate.1} parent=11 // pred_check_branch
        %170 = sbr.rel (%p168) target = $region24
      $region23: #{temporal_weighted_aggregate.1} parent=11 // pred_region
        _
      $region24: #{temporal_weighted_aggregate.1} parent=11 // pred_fallthru
        _
      // Predicated region
      $region25: #{temporal_weighted_aggregate.1} parent=11 // pred_check
        %p171 = pneg %p121
      $region26: #{temporal_weighted_aggregate.1} parent=11 // pred_check_branch
        %173 = sbr.rel (%p171) target = $region28
      $region27: #{temporal_weighted_aggregate.1} parent=11 // pred_region
        _
      $region28: #{temporal_weighted_aggregate.1} parent=11 // pred_fallthru
        _
    $region12: #{temporal_weighted_aggregate.1} parent=5 // pred_fallthru
      _
    %p174 = scmp.lt.s32.totalorder %s11, 2
    // Predicated region
    $region29: #{temporal_weighted_aggregate.1} parent=5 // pred_check
      %p175 = pneg %p174
    $region30: #{temporal_weighted_aggregate.1} parent=5 // pred_check_branch
      %177 = sbr.rel (%p175) target = $region32
    $region31: #{temporal_weighted_aggregate.1} parent=5 // pred_region
      // Predicated region
      $region33: #{temporal_weighted_aggregate.1} parent=31 // pred_check
        %p178 = pneg %p31
      $region34: #{temporal_weighted_aggregate.1} parent=31 // pred_check_branch
        %180 = sbr.rel (%p178) target = $region36
      $region35: #{temporal_weighted_aggregate.1} parent=31 // pred_region
        %p181 = scmp.lt.s32.totalorder %s11, 1
        %s182 = scalar_select %p181, %s11, 1
        %s183 = smul.addr %s182, 8
        %s184 = smul.addr %s183, 8
        %s185 = scalar_lea.vmem %s0, %s184
      $region36: #{temporal_weighted_aggregate.1} parent=31 // pred_fallthru
        _
    $region32: #{temporal_weighted_aggregate.1} parent=5 // pred_fallthru
      _
    %p186 = scmp.le.s32.totalorder 1, %s11
    %p187 = scmp.lt.s32.totalorder %s11, 3
    %p188 = pnand %p186, %p187
    %p189 = pneg %p188
    // Predicated region
    $region37: #{temporal_weighted_aggregate.1} parent=5 // pred_check
      _
    $region38: #{temporal_weighted_aggregate.1} parent=5 // pred_check_branch
      %191 = sbr.rel (%p188) target = $region40
    $region39: #{temporal_weighted_aggregate.1} parent=5 // pred_region
      %s192 = ssub.s32 %s11, 1
      %p193 = scmp.lt.s32.totalorder %s16, 1
      %s194 = scalar_select %p193, %s16, 1
      %s195 = smul.addr %s194, 8
      %s196 = smul.addr %s195, 8
      %s197 = scalar_lea.vmem %s0, %s196
      %p198 = pneg %p37
      %p199 = pneg %p34
      %p200 = pneg %p58
      %p201 = pneg %p55
      %p202 = pneg %p79
      %p203 = pneg %p76
      %p204 = pneg %p100
      %p205 = pneg %p97
      %p206 = pneg %p121
      %p207 = pneg %p118
      %p208 = pneg %p147
      %p209 = pneg %p144
      %p210 = scmp.lt.s32.totalorder %s16, 1
      %s211 = scalar_select %p210, %s16, 1
      %s212 = smul.addr %s211, 8
      %s213 = smul.addr %s212, 8
      %s214 = scalar_lea.vmem %s5, %s213
      %p215 = scmp.lt.s32.totalorder %s16, 1
      %s216 = scalar_select %p215, %s16, 1
      %s217 = smul.addr %s216, 8
      %s218 = smul.addr %s217, 8
      %s219 = scalar_lea.vmem %s0, %s218
      %p220 = scmp.lt.s32.totalorder %s16, 1
      %s221 = scalar_select %p220, %s16, 1
      %s222 = smul.addr %s221, 8
      %s223 = smul.addr %s222, 8
      %s224 = scalar_lea.vmem %s5, %s223
      %v225 = vld [vmem:[%s219] sm:$0xff]
      %v226 = vld [vmem:[%s219 + $0x8] sm:$0xff]
      %v227 = vld [vmem:[%s219 + $0x10] sm:$0xff]
      %v228 = vld [vmem:[%s219 + $0x18] sm:$0xff]
      %v229 = vld [vmem:[%s219 + $0x20] sm:$0xff]
      %v230 = vld [vmem:[%s219 + $0x28] sm:$0xff]
      %v231 = vld [vmem:[%s219 + $0x30] sm:$0xff]
      %v232 = vld [vmem:[%s219 + $0x38] sm:$0xff]
      %v233 = vld [vmem:[%s1] sm:$0xff]
      %v234 = vld [vmem:[%s1 + $0x8] sm:$0xff]
      %v235 = vld [vmem:[%s1 + $0x10] sm:$0xff]
      %v236 = vld [vmem:[%s1 + $0x18] sm:$0xff]
      %v237 = vld [vmem:[%s1 + $0x20] sm:$0xff]
      %v238 = vld [vmem:[%s1 + $0x28] sm:$0xff]
      %v239 = vld [vmem:[%s1 + $0x30] sm:$0xff]
      %v240 = vld [vmem:[%s1 + $0x38] sm:$0xff]
      %v241 = vld [vmem:[%s1 + $0x40] sm:$0xff]
      %v242 = vld [vmem:[%s1 + $0x48] sm:$0xff]
      %v243 = vld [vmem:[%s1 + $0x50] sm:$0xff]
      %v244 = vld [vmem:[%s1 + $0x58] sm:$0xff]
      %v245 = vld [vmem:[%s1 + $0x60] sm:$0xff]
      %v246 = vld [vmem:[%s1 + $0x68] sm:$0xff]
      %v247 = vld [vmem:[%s1 + $0x70] sm:$0xff]
      %v248 = vld [vmem:[%s1 + $0x78] sm:$0xff]
      %v249 = vld [vmem:[%s1 + $0x80] sm:$0xff]
      %v250 = vld [vmem:[%s1 + $0x88] sm:$0xff]
      %v251 = vld [vmem:[%s1 + $0x90] sm:$0xff]
      %v252 = vld [vmem:[%s1 + $0x98] sm:$0xff]
      %v253 = vld [vmem:[%s1 + $0xa0] sm:$0xff]
      %v254 = vld [vmem:[%s1 + $0xa8] sm:$0xff]
      %v255 = vld [vmem:[%s1 + $0xb0] sm:$0xff]
      %v256 = vld [vmem:[%s1 + $0xb8] sm:$0xff]
      %v257 = vld [vmem:[%s1 + $0xc0] sm:$0xff]
      %v258 = vld [vmem:[%s1 + $0xc8] sm:$0xff]
      %v259 = vld [vmem:[%s1 + $0xd0] sm:$0xff]
      %v260 = vld [vmem:[%s1 + $0xd8] sm:$0xff]
      %v261 = vld [vmem:[%s1 + $0xe0] sm:$0xff]
      %v262 = vld [vmem:[%s1 + $0xe8] sm:$0xff]
      %v263 = vld [vmem:[%s1 + $0xf0] sm:$0xff]
      %v264 = vld [vmem:[%s1 + $0xf8] sm:$0xff]
      %v265 = vld [vmem:[%s1 + $0x100] sm:$0xff]
      %v266 = vld [vmem:[%s1 + $0x108] sm:$0xff]
      %v267 = vld [vmem:[%s1 + $0x110] sm:$0xff]
      %v268 = vld [vmem:[%s1 + $0x118] sm:$0xff]
      %v269 = vld [vmem:[%s1 + $0x120] sm:$0xff]
      %v270 = vld [vmem:[%s1 + $0x128] sm:$0xff]
      %v271 = vld [vmem:[%s1 + $0x130] sm:$0xff]
      %v272 = vld [vmem:[%s1 + $0x138] sm:$0xff]
      %v273 = vld [vmem:[%s1 + $0x140] sm:$0xff]
      %v274 = vld [vmem:[%s1 + $0x148] sm:$0xff]
      %v275 = vld [vmem:[%s1 + $0x150] sm:$0xff]
      %v276 = vld [vmem:[%s1 + $0x158] sm:$0xff]
      %v277 = vld [vmem:[%s1 + $0x160] sm:$0xff]
      %v278 = vld [vmem:[%s1 + $0x168] sm:$0xff]
      %v279 = vld [vmem:[%s1 + $0x170] sm:$0xff]
      %v280 = vld [vmem:[%s1 + $0x178] sm:$0xff]
      %v281 = vld [vmem:[%s1 + $0x180] sm:$0xff]
      %v282 = vld [vmem:[%s1 + $0x188] sm:$0xff]
      %v283 = vld [vmem:[%s1 + $0x190] sm:$0xff]
      %v284 = vld [vmem:[%s1 + $0x198] sm:$0xff]
      %v285 = vld [vmem:[%s1 + $0x1a0] sm:$0xff]
      %v286 = vld [vmem:[%s1 + $0x1a8] sm:$0xff]
      %v287 = vld [vmem:[%s1 + $0x1b0] sm:$0xff]
      %v288 = vld [vmem:[%s1 + $0x1b8] sm:$0xff]
      %v289 = vld [vmem:[%s1 + $0x1c0] sm:$0xff]
      %v290 = vld [vmem:[%s1 + $0x1c8] sm:$0xff]
      %v291 = vld [vmem:[%s1 + $0x1d0] sm:$0xff]
      %v292 = vld [vmem:[%s1 + $0x1d8] sm:$0xff]
      %v293 = vld [vmem:[%s1 + $0x1e0] sm:$0xff]
      %v294 = vld [vmem:[%s1 + $0x1e8] sm:$0xff]
      %v295 = vld [vmem:[%s1 + $0x1f0] sm:$0xff]
      %v296 = vld [vmem:[%s1 + $0x1f8] sm:$0xff]
      %297 = vmatprep.subr.mxu0 %v234
      %298 = vmatpush1.msra.mxu0 %v233
      %299 = vmatprep.subr.mxu0 %v236
      %300 = vmatpush1.msra.mxu0 %v235
      %301 = vmatprep.subr.mxu0 %v238
      %302 = vmatpush1.msra.mxu0 %v237
      %303 = vmatprep.subr.mxu0 %v240
      %304 = vmatpush1.msra.mxu0 %v239
      %305 = vmatprep.subr.mxu0 %v242
      %306 = vmatpush1.msra.mxu0 %v241
      %307 = vmatprep.subr.mxu0 %v244
      %308 = vmatpush1.msra.mxu0 %v243
      %309 = vmatprep.subr.mxu0 %v246
      %310 = vmatpush1.msra.mxu0 %v245
      %311 = vmatprep.subr.mxu0 %v248
      %312 = vmatpush1.msra.mxu0 %v247
      %313 = vmatprep.subr.mxu0 %v250
      %314 = vmatpush1.msra.mxu0 %v249
      %315 = vmatprep.subr.mxu0 %v252
      %316 = vmatpush1.msra.mxu0 %v251
      %317 = vmatprep.subr.mxu0 %v254
      %318 = vmatpush1.msra.mxu0 %v253
      %319 = vmatprep.subr.mxu0 %v256
      %320 = vmatpush1.msra.mxu0 %v255
      %321 = vmatprep.subr.mxu0 %v258
      %322 = vmatpush1.msra.mxu0 %v257
      %323 = vmatprep.subr.mxu0 %v260
      %324 = vmatpush1.msra.mxu0 %v259
      %325 = vmatprep.subr.mxu0 %v262
      %326 = vmatpush1.msra.mxu0 %v261
      %327 = vmatprep.subr.mxu0 %v264
      %328 = vmatpush1.msra.mxu0 %v263
      %329 = vmatprep.subr.mxu0 %v266
      %330 = vmatpush1.msra.mxu0 %v265
      %331 = vmatprep.subr.mxu0 %v268
      %332 = vmatpush1.msra.mxu0 %v267
      %333 = vmatprep.subr.mxu0 %v270
      %334 = vmatpush1.msra.mxu0 %v269
      %335 = vmatprep.subr.mxu0 %v272
      %336 = vmatpush1.msra.mxu0 %v271
      %337 = vmatprep.subr.mxu0 %v274
      %338 = vmatpush1.msra.mxu0 %v273
      %339 = vmatprep.subr.mxu0 %v276
      %340 = vmatpush1.msra.mxu0 %v275
      %341 = vmatprep.subr.mxu0 %v278
      %342 = vmatpush1.msra.mxu0 %v277
      %343 = vmatprep.subr.mxu0 %v280
      %344 = vmatpush1.msra.mxu0 %v279
      %345 = vmatprep.subr.mxu0 %v282
      %346 = vmatpush1.msra.mxu0 %v281
      %347 = vmatprep.subr.mxu0 %v284
      %348 = vmatpush1.msra.mxu0 %v283
      %349 = vmatprep.subr.mxu0 %v286
      %350 = vmatpush1.msra.mxu0 %v285
      %351 = vmatprep.subr.mxu0 %v288
      %352 = vmatpush1.msra.mxu0 %v287
      %353 = vmatprep.subr.mxu0 %v290
      %354 = vmatpush1.msra.mxu0 %v289
      %355 = vmatprep.subr.mxu0 %v292
      %356 = vmatpush1.msra.mxu0 %v291
      %357 = vmatprep.subr.mxu0 %v294
      %358 = vmatpush1.msra.mxu0 %v293
      %359 = vmatprep.subr.mxu0 %v296
      %360 = vmatpush1.msra.mxu0 %v295
      %361 = vmatprep.mubr.f32.mxu0 %v226
      %362 = vmatmul.mubr.f32.gmra.mrb[0].mxu0 %v225
      %v363 = vpop.f32.mrb[0].mxu0
      %v364 = vadd.f32 0.0, %v363
      %v365 = vpop.f32.mrb[0].mxu0
      %v366 = vadd.f32 0.0, %v365
      %367 = vmatprep.mubr.f32.mxu0 %v228
      %368 = vmatmul.mubr.f32.gmra.mrb[0].mxu0 %v227
      %v369 = vpop.f32.mrb[0].mxu0
      %v370 = vadd.f32 0.0, %v369
      %v371 = vpop.f32.mrb[0].mxu0
      %v372 = vadd.f32 0.0, %v371
      %373 = vmatprep.mubr.f32.mxu0 %v230
      %374 = vmatmul.mubr.f32.gmra.mrb[0].mxu0 %v229
      %v375 = vpop.f32.mrb[0].mxu0
      %v376 = vadd.f32 0.0, %v375
      %v377 = vpop.f32.mrb[0].mxu0
      %v378 = vadd.f32 0.0, %v377
      %379 = vmatprep.mubr.f32.mxu0 %v232
      %380 = vmatmul.mubr.f32.gmra.mrb[0].mxu0 %v231
      %v381 = vpop.f32.mrb[0].mxu0
      %v382 = vadd.f32 0.0, %v381
      %v383 = vpop.f32.mrb[0].mxu0
      %v384 = vadd.f32 0.0, %v383
      %385 = vdwg.mxu0
      %v386 = vld [vmem:[%s2] sm:$0xff]
      %v387 = vld [vmem:[%s2 + $0x8] sm:$0xff]
      %v388 = vld [vmem:[%s2 + $0x10] sm:$0xff]
      %v389 = vld [vmem:[%s2 + $0x18] sm:$0xff]
      %v390 = vld [vmem:[%s3] sm:$0xff]
      %v391 = vld [vmem:[%s3 + $0x8] sm:$0xff]
      %v392 = vld [vmem:[%s3 + $0x10] sm:$0xff]
      %v393 = vld [vmem:[%s3 + $0x18] sm:$0xff]
      %vm394 = vcmask 261120
      %v396 = vsel %vm394, %v390, 0
      %v399 = vsel %vm394, %v391, 0
      %v402 = vsel %vm394, %v392, 0
      %v405 = vsel %vm394, %v393, 0
      %407 = vmatprep.subr.mxu0 %v366
      %408 = vmatpush1.msra.mxu0 %v364
      %409 = vmatprep.subr.mxu0 %v372
      %410 = vmatpush1.msra.mxu0 %v370
      %411 = vmatprep.subr.mxu0 %v378
      %412 = vmatpush1.msra.mxu0 %v376
      %413 = vmatprep.subr.mxu0 %v384
      %414 = vmatpush1.msra.mxu0 %v382
      %415 = vmatprep.subr.mxu0 0.0
      %416 = vmatpush1.msra.mxu0 0.0
      %417 = vmatprep.subr.mxu0 0.0
      %418 = vmatpush1.msra.mxu0 0.0
      %419 = vmatprep.subr.mxu0 0.0
      %420 = vmatpush1.msra.mxu0 0.0
      %421 = vmatprep.subr.mxu0 0.0
      %422 = vmatpush1.msra.mxu0 0.0
      %423 = vmatprep.subr.mxu0 0.0
      %424 = vmatpush1.msra.mxu0 0.0
      %425 = vmatprep.subr.mxu0 0.0
      %426 = vmatpush1.msra.mxu0 0.0
      %427 = vmatprep.subr.mxu0 0.0
      %428 = vmatpush1.msra.mxu0 0.0
      %429 = vmatprep.subr.mxu0 0.0
      %430 = vmatpush1.msra.mxu0 0.0
      %431 = vmatprep.subr.mxu0 0.0
      %432 = vmatpush1.msra.mxu0 0.0
      %433 = vmatprep.subr.mxu0 0.0
      %434 = vmatpush1.msra.mxu0 0.0
      %435 = vmatprep.subr.mxu0 0.0
      %436 = vmatpush1.msra.mxu0 0.0
      %437 = vmatprep.subr.mxu0 0.0
      %438 = vmatpush1.msra.mxu0 0.0
      %439 = vmatprep.subr.mxu0 0.0
      %440 = vmatpush1.msra.mxu0 0.0
      %441 = vmatprep.subr.mxu0 0.0
      %442 = vmatpush1.msra.mxu0 0.0
      %443 = vmatprep.subr.mxu0 0.0
      %444 = vmatpush1.msra.mxu0 0.0
      %445 = vmatprep.subr.mxu0 0.0
      %446 = vmatpush1.msra.mxu0 0.0
      %447 = vmatprep.subr.mxu0 0.0
      %448 = vmatpush1.msra.mxu0 0.0
      %449 = vmatprep.subr.mxu0 0.0
      %450 = vmatpush1.msra.mxu0 0.0
      %451 = vmatprep.subr.mxu0 0.0
      %452 = vmatpush1.msra.mxu0 0.0
      %453 = vmatprep.subr.mxu0 0.0
      %454 = vmatpush1.msra.mxu0 0.0
      %455 = vmatprep.subr.mxu0 0.0
      %456 = vmatpush1.msra.mxu0 0.0
      %457 = vmatprep.subr.mxu0 0.0
      %458 = vmatpush1.msra.mxu0 0.0
      %459 = vmatprep.subr.mxu0 0.0
      %460 = vmatpush1.msra.mxu0 0.0
      %461 = vmatprep.subr.mxu0 0.0
      %462 = vmatpush1.msra.mxu0 0.0
      %463 = vmatprep.subr.mxu0 0.0
      %464 = vmatpush1.msra.mxu0 0.0
      %465 = vmatprep.subr.mxu0 0.0
      %466 = vmatpush1.msra.mxu0 0.0
      %467 = vmatprep.subr.mxu0 0.0
      %468 = vmatpush1.msra.mxu0 0.0
      %469 = vmatprep.subr.mxu0 0.0
      %470 = vmatpush1.msra.mxu0 0.0
      %471 = vmatprep.mubr.f32.mxu0 0.0
      %472 = vmatmul.mubr.f32.gmra.mrb[0].mxu0 %v396
      %v473 = vpop.f32.mrb[0].mxu0
      %v474 = vadd.f32 0.0, %v473
      %v475 = vpop.f32.mrb[0].mxu0
      %v476 = vadd.f32 0.0, %v475
      %477 = vmatprep.mubr.f32.mxu0 0.0
      %478 = vmatmul.mubr.f32.gmra.mrb[0].mxu0 %v399
      %v479 = vpop.f32.mrb[0].mxu0
      %v480 = vadd.f32 0.0, %v479
      %v481 = vpop.f32.mrb[0].mxu0
      %v482 = vadd.f32 0.0, %v481
      %483 = vmatprep.mubr.f32.mxu0 0.0
      %484 = vmatmul.mubr.f32.gmra.mrb[0].mxu0 %v402
      %v485 = vpop.f32.mrb[0].mxu0
      %v486 = vadd.f32 0.0, %v485
      %v487 = vpop.f32.mrb[0].mxu0
      %v488 = vadd.f32 0.0, %v487
      %489 = vmatprep.mubr.f32.mxu0 0.0
      %490 = vmatmul.mubr.f32.gmra.mrb[0].mxu0 %v405
      %v491 = vpop.f32.mrb[0].mxu0
      %v492 = vadd.f32 0.0, %v491
      %v493 = vpop.f32.mrb[0].mxu0
      %v494 = vadd.f32 0.0, %v493
      %495 = vdwg.mxu0
      %v497 = vsel %vm394, %v386, 0
      %v500 = vsel %vm394, %v387, 0
      %v503 = vsel %vm394, %v388, 0
      %v506 = vsel %vm394, %v389, 0
      %508 = vmatprep.subr.mxu0 %v226
      %509 = vmatpush1.msra.mxu0 %v225
      %510 = vmatprep.subr.mxu0 %v228
      %511 = vmatpush1.msra.mxu0 %v227
      %512 = vmatprep.subr.mxu0 %v230
      %513 = vmatpush1.msra.mxu0 %v229
      %514 = vmatprep.subr.mxu0 %v232
      %515 = vmatpush1.msra.mxu0 %v231
      %516 = vmatprep.subr.mxu0 0.0
      %517 = vmatpush1.msra.mxu0 0.0
      %518 = vmatprep.subr.mxu0 0.0
      %519 = vmatpush1.msra.mxu0 0.0
      %520 = vmatprep.subr.mxu0 0.0
      %521 = vmatpush1.msra.mxu0 0.0
      %522 = vmatprep.subr.mxu0 0.0
      %523 = vmatpush1.msra.mxu0 0.0
      %524 = vmatprep.subr.mxu0 0.0
      %525 = vmatpush1.msra.mxu0 0.0
      %526 = vmatprep.subr.mxu0 0.0
      %527 = vmatpush1.msra.mxu0 0.0
      %528 = vmatprep.subr.mxu0 0.0
      %529 = vmatpush1.msra.mxu0 0.0
      %530 = vmatprep.subr.mxu0 0.0
      %531 = vmatpush1.msra.mxu0 0.0
      %532 = vmatprep.subr.mxu0 0.0
      %533 = vmatpush1.msra.mxu0 0.0
      %534 = vmatprep.subr.mxu0 0.0
      %535 = vmatpush1.msra.mxu0 0.0
      %536 = vmatprep.subr.mxu0 0.0
      %537 = vmatpush1.msra.mxu0 0.0
      %538 = vmatprep.subr.mxu0 0.0
      %539 = vmatpush1.msra.mxu0 0.0
      %540 = vmatprep.subr.mxu0 0.0
      %541 = vmatpush1.msra.mxu0 0.0
      %542 = vmatprep.subr.mxu0 0.0
      %543 = vmatpush1.msra.mxu0 0.0
      %544 = vmatprep.subr.mxu0 0.0
      %545 = vmatpush1.msra.mxu0 0.0
      %546 = vmatprep.subr.mxu0 0.0
      %547 = vmatpush1.msra.mxu0 0.0
      %548 = vmatprep.subr.mxu0 0.0
      %549 = vmatpush1.msra.mxu0 0.0
      %550 = vmatprep.subr.mxu0 0.0
      %551 = vmatpush1.msra.mxu0 0.0
      %552 = vmatprep.subr.mxu0 0.0
      %553 = vmatpush1.msra.mxu0 0.0
      %554 = vmatprep.subr.mxu0 0.0
      %555 = vmatpush1.msra.mxu0 0.0
      %556 = vmatprep.subr.mxu0 0.0
      %557 = vmatpush1.msra.mxu0 0.0
      %558 = vmatprep.subr.mxu0 0.0
      %559 = vmatpush1.msra.mxu0 0.0
      %560 = vmatprep.subr.mxu0 0.0
      %561 = vmatpush1.msra.mxu0 0.0
      %562 = vmatprep.subr.mxu0 0.0
      %563 = vmatpush1.msra.mxu0 0.0
      %564 = vmatprep.subr.mxu0 0.0
      %565 = vmatpush1.msra.mxu0 0.0
      %566 = vmatprep.subr.mxu0 0.0
      %567 = vmatpush1.msra.mxu0 0.0
      %568 = vmatprep.subr.mxu0 0.0
      %569 = vmatpush1.msra.mxu0 0.0
      %570 = vmatprep.subr.mxu0 0.0
      %571 = vmatpush1.msra.mxu0 0.0
      %572 = vmatprep.mubr.f32.mxu0 0.0
      %573 = vmatmul.mubr.f32.gmra.mrb[0].mxu0 %v497
      %v574 = vpop.f32.mrb[0].mxu0
      %v575 = vadd.f32 %v474, %v574
      %v576 = vpop.f32.mrb[0].mxu0
      %v577 = vadd.f32 %v476, %v576
      %578 = vmatprep.mubr.f32.mxu0 0.0
      %579 = vmatmul.mubr.f32.gmra.mrb[0].mxu0 %v500
      %v580 = vpop.f32.mrb[0].mxu0
      %v581 = vadd.f32 %v480, %v580
      %v582 = vpop.f32.mrb[0].mxu0
      %v583 = vadd.f32 %v482, %v582
      %584 = vmatprep.mubr.f32.mxu0 0.0
      %585 = vmatmul.mubr.f32.gmra.mrb[0].mxu0 %v503
      %v586 = vpop.f32.mrb[0].mxu0
      %v587 = vadd.f32 %v486, %v586
      %v588 = vpop.f32.mrb[0].mxu0
      %v589 = vadd.f32 %v488, %v588
      %590 = vmatprep.mubr.f32.mxu0 0.0
      %591 = vmatmul.mubr.f32.gmra.mrb[0].mxu0 %v506
      %v592 = vpop.f32.mrb[0].mxu0
      %v593 = vadd.f32 %v492, %v592
      %v594 = vpop.f32.mrb[0].mxu0
      %v595 = vadd.f32 %v494, %v594
      %596 = vdwg.mxu0
      %v597 = vld [vmem:[%s4] sm:$0xff]
      %v598 = vld [vmem:[%s4 + $0x8] sm:$0xff]
      %v599 = vld [vmem:[%s4 + $0x10] sm:$0xff]
      %v600 = vld [vmem:[%s4 + $0x18] sm:$0xff]
      %602 = vset.pattern.permute.xlu0 0
      %603 = vperm.xlu0 %602, %v597
      %v604 = vpop.permute.xlu0 %603
      %607 = vset.pattern.permute.xlu0 0
      %608 = vperm.xlu0 %607, %v598
      %v609 = vpop.permute.xlu0 %608
      %612 = vset.pattern.permute.xlu0 0
      %613 = vperm.xlu0 %612, %v599
      %v614 = vpop.permute.xlu0 %613
      %617 = vset.pattern.permute.xlu0 0
      %618 = vperm.xlu0 %617, %v600
      %v619 = vpop.permute.xlu0 %618
      %v621 = vadd.f32 %v575, %v604
      %v622 = vadd.f32 %v577, %v604
      %v623 = vadd.f32 %v581, %v609
      %v624 = vadd.f32 %v583, %v609
      %v625 = vadd.f32 %v587, %v614
      %v626 = vadd.f32 %v589, %v614
      %v627 = vadd.f32 %v593, %v619
      %v628 = vadd.f32 %v595, %v619
      %629 = vst [vmem:[%s224] sm:$0xff] %v621
      %630 = vst [vmem:[%s224 + $0x8] sm:$0xff] %v622
      %631 = vst [vmem:[%s224 + $0x10] sm:$0xff] %v623
      %632 = vst [vmem:[%s224 + $0x18] sm:$0xff] %v624
      %633 = vst [vmem:[%s224 + $0x20] sm:$0xff] %v625
      %634 = vst [vmem:[%s224 + $0x28] sm:$0xff] %v626
      %635 = vst [vmem:[%s224 + $0x30] sm:$0xff] %v627
      %636 = vst [vmem:[%s224 + $0x38] sm:$0xff] %v628
      %p637 = scmp.lt.s32.totalorder %s16, 1
      %s638 = scalar_select %p637, %s16, 1
      %s639 = smul.addr %s638, 8
      %s640 = smul.addr %s639, 8
      %s641 = scalar_lea.vmem %s5, %s640
      // Predicated region
      $region41: #{temporal_weighted_aggregate.1} parent=39 // pred_check
        %p642 = pneg %p144
      $region42: #{temporal_weighted_aggregate.1} parent=39 // pred_check_branch
        %644 = sbr.rel (%p642) target = $region44
      $region43: #{temporal_weighted_aggregate.1} parent=39 // pred_region
        _
      $region44: #{temporal_weighted_aggregate.1} parent=39 // pred_fallthru
        _
    $region40: #{temporal_weighted_aggregate.1} parent=5 // pred_fallthru
      _
    %p645 = scmp.le.s32.totalorder 2, %s11
    // Predicated region
    $region45: #{temporal_weighted_aggregate.1} parent=5 // pred_check
      %p646 = pneg %p645
    $region46: #{temporal_weighted_aggregate.1} parent=5 // pred_check_branch
      %648 = sbr.rel (%p646) target = $region48
    $region47: #{temporal_weighted_aggregate.1} parent=5 // pred_region
      %s649 = ssub.s32 %s11, 2
      // Predicated region
      $region49: #{temporal_weighted_aggregate.1} parent=47 // pred_check
        %p650 = pneg %p150
      $region50: #{temporal_weighted_aggregate.1} parent=47 // pred_check_branch
        %652 = sbr.rel (%p650) target = $region52
      $region51: #{temporal_weighted_aggregate.1} parent=47 // pred_region
        %p653 = scmp.lt.s32.totalorder %s17, 1
        %s654 = scalar_select %p653, %s17, 1
        %s655 = smul.addr %s654, 8
        %s656 = smul.addr %s655, 8
        %s657 = scalar_lea.vmem %s5, %s656
      $region52: #{temporal_weighted_aggregate.1} parent=47 // pred_fallthru
        _
    $region48: #{temporal_weighted_aggregate.1} parent=5 // pred_fallthru
      _
  $region6: #{temporal_weighted_aggregate.1} parent=0 // loop_footer
    %s15 = sadd.s32 1, %s11
  $region7: #{temporal_weighted_aggregate.1} parent=0 // loop_footer_branch
    %10 = sbr.rel target = $region3
  $region8: #{temporal_weighted_aggregate.1} parent=0 // loop_exit
    _

</llo_original>
